<compile_context>
chip_gen: v6e
topology: v6e:2x2x1
jax: 0.10.0
libtpu: 0.0.40
codegen_flags: <defaults>
</compile_context>

<pallas_src>
import functools

import jax
import jax.numpy as jnp
from jax import lax
from jax.experimental import pallas as pl
from jax.experimental.pallas import tpu as pltpu


_K_PREFS = (256, 128)   # Cin DMA-chunk preferences for the dilated branches (v5e-safe)


@functools.lru_cache(maxsize=1)
def _vmem_limit():
    """Generation-aware VMEM request: ~3/4 of physical, capped at 100 MiB."""
    cap = None
    try:
        info = pltpu.get_tpu_info()
        cap = int(getattr(info, "vmem_capacity_bytes", 0)) or None
    except Exception:
        cap = None
    if cap is None:
        cap = 64 * 1024 * 1024          # conservative (v7x-sized) fallback
    return max(32 * 1024 * 1024, min(cap * 3 // 4, 100 * 1024 * 1024))


def _pick_div(n, prefs):
    """Largest preferred chunk that divides n, else the full dimension."""
    for p in prefs:
        if n % p == 0:
            return p
    return n


# ----------------------------------------------------------------------------
# Kernel 1: 1x1 conv + folded BN + ReLU, with fused global-avg-pool column sums
# (weights resident; no K grid axis; one matmul per row tile).
# ----------------------------------------------------------------------------
def _conv1x1_pool_kernel(x_ref, w_ref, s_ref, b_ref, o_ref, xsum_ref):
    xb = x_ref[0]                                                    # (TR, Cin) bf16
    y = jnp.dot(xb, w_ref[...], preferred_element_type=jnp.float32)  # (TR, Cout) f32
    o_ref[0] = jnp.maximum(y * s_ref[...] + b_ref[...], 0.0).astype(o_ref.dtype)

    # Per-tile column sum of x (for the pooling branch) — written to row 0 of an
    # (8, Cin) block so the output block stays sublane-aligned.
    col_sum = jnp.sum(xb.astype(jnp.float32), axis=0, keepdims=True)  # (1, Cin)
    rows = lax.broadcasted_iota(jnp.int32, (8, xb.shape[1]), 0)
    xsum_ref[0, 0] = jnp.where(rows == 0, col_sum, 0.0)


def conv1x1_bn_relu_pool(x, w, scale, bias, *, tile_rows, out_dtype=jnp.bfloat16):
    """x: (N, M, Cin) bf16, w: (Cin, Cout) bf16, scale/bias: (Cout,) f32.
    Returns (y: (N, M, Cout) out_dtype, xsum: (N, R, 8, Cin) f32 partial col-sums)."""
    N, M, Cin = x.shape
    Cout = w.shape[1]
    R = M // tile_rows
    return pl.pallas_call(
        _conv1x1_pool_kernel,
        out_shape=(jax.ShapeDtypeStruct((N, M, Cout), out_dtype),
                   jax.ShapeDtypeStruct((N, R, 8, Cin), jnp.float32)),
        grid=(N, R),
        in_specs=[
            pl.BlockSpec((1, tile_rows, Cin), lambda n, r: (n, r, 0)),
            pl.BlockSpec((Cin, Cout), lambda n, r: (0, 0)),      # resident weights
            pl.BlockSpec((1, Cout), lambda n, r: (0, 0)),
            pl.BlockSpec((1, Cout), lambda n, r: (0, 0)),
        ],
        out_specs=(pl.BlockSpec((1, tile_rows, Cout), lambda n, r: (n, r, 0)),
                   pl.BlockSpec((1, 1, 8, Cin), lambda n, r: (n, r, 0, 0))),
        compiler_params=pltpu.CompilerParams(
            dimension_semantics=("parallel", "parallel"),
            vmem_limit_bytes=_vmem_limit()),
    )(x, w, scale.reshape(1, Cout), bias.reshape(1, Cout))


# ----------------------------------------------------------------------------
# Kernel 2: dilated 3x3 conv + BN + ReLU — row-strip tiled with halo.
# The halo'd strip is fetched with a manual, double-buffered make_async_copy
# (overlapping windows aren't expressible with plain Blocked BlockSpecs).
# ----------------------------------------------------------------------------
def _dilated_strip_kernel(x_hbm, w_ref, s_ref, b_ref, o_ref, buf, sem,
                          *, RS, W, d, dmax, nk, tk):
    n = pl.program_id(0)
    r = pl.program_id(1)
    Hs = RS + 2 * d                       # strip rows incl. halo
    Ws = W + 2 * d                        # strip cols incl. halo
    row_start = r * RS + (dmax - d)       # offset into the dmax-padded image
    col_start = dmax - d
    cout = o_ref.shape[-1]

    def strip_copy(k, slot):
        return pltpu.make_async_copy(
            x_hbm.at[n, pl.ds(row_start, Hs), pl.ds(col_start, Ws),
                     pl.ds(k * tk, tk)],
            buf.at[slot], sem.at[slot])

    strip_copy(0, 0).start()

    acc = None
    for k in range(nk):                   # Cin chunks, double-buffered DMA
        slot = k % 2
        strip_copy(k, slot).wait()
        if k + 1 < nk:
            strip_copy(k + 1, 1 - slot).start()
        part = None
        for kw in range(3):
            xw = buf[slot, :, kw * d:kw * d + W, :]              # (Hs, W, tk)
            for kh in range(3):
                tap = xw[kh * d:kh * d + RS].reshape(RS * W, tk)  # leading-dim slice
                c = jnp.dot(tap, w_ref[kh, kw, k * tk:(k + 1) * tk, :],
                            preferred_element_type=jnp.float32)
                part = c if part is None else part + c
        acc = part if acc is None else acc + part                 # one acc add per chunk

    y = acc * s_ref[...] + b_ref[...]
    o_ref[0] = jnp.maximum(y, 0.0).astype(o_ref.dtype)


def dilated_conv3x3_bn_relu(xp, w, scale, bias, *, d, dmax, H_out, W, RS,
                            out_dtype=jnp.bfloat16):
    """xp: (N, H_out+2*dmax, W+2*dmax, Cin) bf16 (shared padded image),
    w: (3, 3, Cin, Cout) bf16 (HWIO). Returns (N, H_out*W, Cout)."""
    N, _, _, Cin = xp.shape
    Cout = w.shape[-1]
    tk = _pick_div(Cin, _K_PREFS)
    nk = Cin // tk
    n_strips = H_out // RS
    Hs, Ws = RS + 2 * d, W + 2 * d
    kern = functools.partial(_dilated_strip_kernel,
                             RS=RS, W=W, d=d, dmax=dmax, nk=nk, tk=tk)
    return pl.pallas_call(
        kern,
        out_shape=jax.ShapeDtypeStruct((N, H_out * W, Cout), out_dtype),
        grid=(N, n_strips),
        in_specs=[
            pl.BlockSpec(memory_space=pl.ANY),                       # raw HBM image
            pl.BlockSpec((3, 3, Cin, Cout), lambda n, r: (0, 0, 0, 0)),  # resident w
            pl.BlockSpec((1, Cout), lambda n, r: (0, 0)),
            pl.BlockSpec((1, Cout), lambda n, r: (0, 0)),
        ],
        out_specs=pl.BlockSpec((1, RS * W, Cout), lambda n, r: (n, r, 0)),
        scratch_shapes=[pltpu.VMEM((2, Hs, Ws, tk), xp.dtype),
                        pltpu.SemaphoreType.DMA((2,))],
        compiler_params=pltpu.CompilerParams(
            dimension_semantics=("parallel", "parallel"),
            vmem_limit_bytes=_vmem_limit()),
    )(xp, w, scale.reshape(1, Cout), bias.reshape(1, Cout))


# ----------------------------------------------------------------------------
# Kernel 3: projection — reads the conv-branch outputs directly (no HBM concat),
# adds the per-sample pooled term, then BN + ReLU.
# ----------------------------------------------------------------------------
def _make_proj_kernel(n_br):
    def kernel(*args):
        y_refs = args[:n_br]
        pool_ref, w_ref, s_ref, b_ref, o_ref = args[n_br:n_br + 5]
        acc = jnp.dot(y_refs[0][0], w_ref[0], preferred_element_type=jnp.float32)
        for i in range(1, n_br):
            acc = acc + jnp.dot(y_refs[i][0], w_ref[i], preferred_element_type=jnp.float32)
        acc = acc + pool_ref[0]                      # pooled-branch term, row-broadcast
        y = acc * s_ref[...] + b_ref[...]
        o_ref[0] = jnp.maximum(y, 0.0).astype(o_ref.dtype)
    return kernel


def project_bn_relu(branches, pool_contrib, w_br, scale, bias, *, tile_rows,
                    out_dtype=jnp.float32):
    """branches: list of (N, M, Cout) bf16; pool_contrib: (N, 1, Cproj) f32;
    w_br: (n_br, Cout, Cproj) bf16."""
    n_br = len(branches)
    N, M, Cout = branches[0].shape
    Cproj = w_br.shape[-1]
    R = M // tile_rows
    in_specs = [pl.BlockSpec((1, tile_rows, Cout), lambda n, r: (n, r, 0))
                for _ in range(n_br)]
    in_specs += [
        pl.BlockSpec((1, 1, Cproj), lambda n, r: (n, 0, 0)),
        pl.BlockSpec((n_br, Cout, Cproj), lambda n, r: (0, 0, 0)),   # resident weights
        pl.BlockSpec((1, Cproj), lambda n, r: (0, 0)),
        pl.BlockSpec((1, Cproj), lambda n, r: (0, 0)),
    ]
    return pl.pallas_call(
        _make_proj_kernel(n_br),
        out_shape=jax.ShapeDtypeStruct((N, M, Cproj), out_dtype),
        grid=(N, R),
        in_specs=in_specs,
        out_specs=pl.BlockSpec((1, tile_rows, Cproj), lambda n, r: (n, r, 0)),
        compiler_params=pltpu.CompilerParams(
            dimension_semantics=("parallel", "parallel"),
            vmem_limit_bytes=_vmem_limit()),
    )(*branches, pool_contrib, w_br, scale.reshape(1, Cproj), bias.reshape(1, Cproj))


# ----------------------------------------------------------------------------
# ASPP forward
# ----------------------------------------------------------------------------
def aspp_forward(x_nchw, p, rates, out_dtype=jnp.float32):
    # out_dtype=jnp.bfloat16 halves the projection's HBM write traffic if the
    # consumer tolerates it; default f32 preserves the PyTorch forward dtype.
    N, Cin, H, W = x_nchw.shape
    Cout = p["w0"].shape[1]
    rates = tuple(rates)
    dmax = max(rates)

    # Row-strip height: 8 output rows (sublane-friendly); full H when tiny.
    RS = H if H <= 8 else 8
    n_strips = -(-H // RS)
    Hpad = n_strips * RS

    x = jnp.transpose(x_nchw, (0, 2, 3, 1)).astype(jnp.bfloat16)       # NHWC bf16
    x_rows = jnp.pad(x, ((0, 0), (0, Hpad - H), (0, 0), (0, 0))) if Hpad > H else x
    x_flat = x_rows.reshape(N, Hpad * W, Cin)
    # Single shared halo pad (max dilation) for all dilated branches.
    xp = jnp.pad(x_rows, ((0, 0), (dmax, dmax), (dmax, dmax), (0, 0)))

    # Group strips into bigger row tiles for the mem-bound 1x1 / projection kernels.
    grp = 1
    while n_strips % (grp * 2) == 0 and RS * W * grp * 2 <= 2048:
        grp *= 2
    tile_rows = RS * W * grp

    # Branch 0: 1x1 conv + BN + ReLU, with fused pooling column sums.
    y0, xsum = conv1x1_bn_relu_pool(
        x_flat, p["w0"].astype(jnp.bfloat16), p["s0"], p["b0"], tile_rows=tile_rows)
    branches = [y0]

    # Dilated 3x3 branches (share xp).
    for i, d in enumerate(rates):
        branches.append(dilated_conv3x3_bn_relu(
            xp, p["wr"][i].astype(jnp.bfloat16), p["sr"][i], p["br"][i],
            d=d, dmax=dmax, H_out=Hpad, W=W, RS=RS))

    n_br = len(branches)
    wproj = p["wproj"]                                   # ((n_br+1)*Cout, Cproj)
    Cproj = wproj.shape[1]
    w_br = wproj[: n_br * Cout].reshape(n_br, Cout, Cproj).astype(jnp.bfloat16)
    w_pool = wproj[n_br * Cout:]                         # (Cout, Cproj) f32

    # Pooling branch epilogue in plain JAX (tiny tensors; padded rows are zero).
    pooled = xsum.sum(axis=(1, 2)) / float(H * W)                         # (N, Cin)
    yp = jnp.maximum(pooled @ p["wp"] * p["sp"] + p["bp"], 0.0)           # (N, Cout)
    pool_contrib = (yp @ w_pool).reshape(N, 1, Cproj).astype(jnp.float32)

    out = project_bn_relu(branches, pool_contrib, w_br, p["sproj"], p["bproj"],
                          tile_rows=tile_rows, out_dtype=out_dtype)
    out = out[:, : H * W, :].reshape(N, H, W, Cproj)     # drop padded rows
    # TODO(synk): nn.Dropout(0.5) is identity in eval mode; training-mode dropout not implemented.
    # TODO(synk): an NHWC consumer could skip this final relayout; kept for PyTorch NCHW parity.
    return jnp.transpose(out, (0, 3, 1, 2))


# ----------------------------------------------------------------------------
# Pure-JAX reference mirroring the kernels' bf16-operand quantization
# ----------------------------------------------------------------------------
def aspp_reference(x_nchw, p, rates):
    q = lambda a: a.astype(jnp.bfloat16).astype(jnp.float32)
    relu = lambda v: jnp.maximum(v, 0.0)
    N, Cin, H, W = x_nchw.shape
    Cout = p["w0"].shape[1]

    x = q(jnp.transpose(x_nchw, (0, 2, 3, 1)).astype(jnp.float32))   # NHWC

    outs = [q(relu(jnp.einsum("nhwc,cd->nhwd", x, q(p["w0"])) * p["s0"] + p["b0"]))]
    for i, d in enumerate(rates):
        xpad = jnp.pad(x, ((0, 0), (d, d), (d, d), (0, 0)))
        wq = q(p["wr"][i])
        acc = jnp.zeros((N, H, W, Cout), jnp.float32)
        for kh in range(3):
            for kw in range(3):
                tap = xpad[:, kh * d:kh * d + H, kw * d:kw * d + W, :]
                acc = acc + jnp.einsum("nhwc,cd->nhwd", tap, wq[kh, kw])
        outs.append(q(relu(acc * p["sr"][i] + p["br"][i])))

    pooled = jnp.mean(x, axis=(1, 2))                                 # (N, Cin)
    yp = relu(pooled @ p["wp"] * p["sp"] + p["bp"])                   # (N, Cout)

    n_br = 1 + len(rates)
    w_br = q(p["wproj"][: n_br * Cout])
    w_pool = p["wproj"][n_br * Cout:]
    cat = jnp.concatenate(outs, axis=-1)                              # (N, H, W, n_br*Cout)
    proj = jnp.einsum("nhwc,cd->nhwd", cat, w_br) + (yp @ w_pool)[:, None, None, :]
    out = relu(proj * p["sproj"] + p["bproj"])
    return jnp.transpose(out, (0, 3, 1, 2))


# ----------------------------------------------------------------------------
# Deterministic synthetic parameters (folded BatchNorm)
# ----------------------------------------------------------------------------
def fold_bn(gamma, beta, mean, var, eps=1e-5):
    scale = gamma / jnp.sqrt(var + eps)
    bias = beta - mean * scale
    return scale, bias


def make_params(key, in_channels, out_channels, rates):
    keys = iter(jax.random.split(key, 64))

    def nrm(shape, s=0.1):
        return s * jax.random.normal(next(keys), shape, dtype=jnp.float32)

    def bn(c):
        gamma = 1.0 + 0.1 * jax.random.normal(next(keys), (c,), dtype=jnp.float32)
        beta = 0.1 * jax.random.normal(next(keys), (c,), dtype=jnp.float32)
        mean = 0.1 * jax.random.normal(next(keys), (c,), dtype=jnp.float32)
        var = jax.random.uniform(next(keys), (c,), dtype=jnp.float32, minval=0.5, maxval=1.5)
        return fold_bn(gamma, beta, mean, var)

    p = {}
    p["w0"] = nrm((in_channels, out_channels))
    p["s0"], p["b0"] = bn(out_channels)
    p["wr"], p["sr"], p["br"] = [], [], []
    for _ in rates:
        p["wr"].append(nrm((3, 3, in_channels, out_channels)))   # HWIO
        s, b = bn(out_channels)
        p["sr"].append(s)
        p["br"].append(b)
    p["wp"] = nrm((in_channels, out_channels))
    p["sp"], p["bp"] = bn(out_channels)
    n_branches = 1 + len(rates) + 1
    p["wproj"] = nrm((n_branches * out_channels, out_channels))
    p["sproj"], p["bproj"] = bn(out_channels)
    return p


if __name__ == "__main__":
    key = jax.random.PRNGKey(0)
    k_x, k_p = jax.random.split(key)

    # H=12 deliberately not a multiple of the 8-row strip: exercises the
    # row-pad + crop path as well as the multi-strip halo DMA.
    N, Cin, H, W = 2, 4, 12, 16
    out_channels = 8
    rates = (1, 2, 3)

    x = jax.random.normal(k_x, (N, Cin, H, W), dtype=jnp.float32)   # NCHW like PyTorch
    params = make_params(k_p, Cin, out_channels, rates)

    out = jax.block_until_ready(aspp_forward(x, params, rates))
    ref = jax.block_until_ready(aspp_reference(x, params, rates))

    assert out.shape == (N, out_channels, H, W), out.shape
    max_err = float(jnp.max(jnp.abs(out.astype(jnp.float32) - ref)))
    assert max_err < 2e-2, f"max abs error too large: {max_err}"

    print("KERNEL_OK")
</pallas_src>

<mosaic_0001>
module attributes {stable_mosaic.version = 11 : i64} {
  func.func @_conv1x1_pool_kernel(%arg0: i32, %arg1: i32, %arg2: memref<1x256x4xbf16, #tpu.memory_space<vmem>>, %arg3: memref<4x8xbf16, #tpu.memory_space<vmem>>, %arg4: memref<1x8xf32, #tpu.memory_space<vmem>>, %arg5: memref<1x8xf32, #tpu.memory_space<vmem>>, %arg6: memref<1x256x8xbf16, #tpu.memory_space<vmem>>, %arg7: memref<1x1x8x4xf32, #tpu.memory_space<vmem>>) attributes {dimension_semantics = [#tpu.dimension_semantics<parallel>, #tpu.dimension_semantics<parallel>], iteration_bounds = array<i64: 2, 1>, scalar_prefetch = 0 : i64, scratch_operands = 0 : i64, tpu.core_type = #tpu.core_type<tc>, window_params = [{transform_indices = @transform_0, window_bounds = array<i64: 1, 256, 4>}, {pipeline_mode = #tpu.pipeline_mode<synchronous>, transform_indices = @transform_1, window_bounds = array<i64: 4, 8>}, {pipeline_mode = #tpu.pipeline_mode<synchronous>, transform_indices = @transform_2, window_bounds = array<i64: 1, 8>}, {pipeline_mode = #tpu.pipeline_mode<synchronous>, transform_indices = @transform_3, window_bounds = array<i64: 1, 8>}, {transform_indices = @transform_4, window_bounds = array<i64: 1, 256, 8>}, {transform_indices = @transform_5, window_bounds = array<i64: 1, 1, 8, 4>}]} {
    %c0 = arith.constant 0 : index
    %c0_0 = arith.constant 0 : index
    %c0_1 = arith.constant 0 : index
    %0 = vector.load %arg2[%c0, %c0_0, %c0_1] : memref<1x256x4xbf16, #tpu.memory_space<vmem>>, vector<1x256x4xbf16>
    %1 = vector.shape_cast %0 : vector<1x256x4xbf16> to vector<256x4xbf16>
    %c0_2 = arith.constant 0 : index
    %c0_3 = arith.constant 0 : index
    %2 = vector.load %arg3[%c0_2, %c0_3] : memref<4x8xbf16, #tpu.memory_space<vmem>>, vector<4x8xbf16>
    %cst = arith.constant dense<0.000000e+00> : vector<256x8xf32>
    %3 = tpu.matmul %1, %2, %cst {dimension_numbers = #tpu.dot_dimension_numbers<[1], [0], [0], [1], [0, 0, 1, 1], [], []>} : vector<256x4xbf16>, vector<4x8xbf16>, vector<256x8xf32> -> vector<256x8xf32>
    %c0_4 = arith.constant 0 : index
    %c0_5 = arith.constant 0 : index
    %4 = vector.load %arg4[%c0_4, %c0_5] : memref<1x8xf32, #tpu.memory_space<vmem>>, vector<1x8xf32>
    %5 = vector.broadcast %4 : vector<1x8xf32> to vector<256x8xf32>
    %6 = arith.mulf %3, %5 : vector<256x8xf32>
    %c0_6 = arith.constant 0 : index
    %c0_7 = arith.constant 0 : index
    %7 = vector.load %arg5[%c0_6, %c0_7] : memref<1x8xf32, #tpu.memory_space<vmem>>, vector<1x8xf32>
    %8 = vector.broadcast %7 : vector<1x8xf32> to vector<256x8xf32>
    %9 = arith.addf %6, %8 : vector<256x8xf32>
    %cst_8 = arith.constant 0.000000e+00 : f32
    %10 = vector.broadcast %cst_8 : f32 to vector<256x8xf32>
    %11 = arith.maximumf %9, %10 : vector<256x8xf32>
    %12 = arith.truncf %11 : vector<256x8xf32> to vector<256x8xbf16>
    %c0_9 = arith.constant 0 : index
    %c0_10 = arith.constant 0 : index
    %c0_11 = arith.constant 0 : index
    %13 = vector.load %arg6[%c0_9, %c0_10, %c0_11] : memref<1x256x8xbf16, #tpu.memory_space<vmem>>, vector<1x256x8xbf16>
    %14 = vector.shape_cast %13 : vector<1x256x8xbf16> to vector<256x8xbf16>
    %15 = vector.shape_cast %12 : vector<256x8xbf16> to vector<1x256x8xbf16>
    tpu.vector_store %arg6[%c0_9, %c0_10, %c0_11], %15 {strides = array<i32>} : memref<1x256x8xbf16, #tpu.memory_space<vmem>>, vector<1x256x8xbf16>,
    %16 = arith.extf %1 : vector<256x4xbf16> to vector<256x4xf32>
    %cst_12 = arith.constant dense<0.000000e+00> : vector<4xf32>
    %17 = vector.multi_reduction <add>, %16, %cst_12 [0] : vector<256x4xf32> to vector<4xf32>
    %18 = vector.shape_cast %17 : vector<4xf32> to vector<1x4xf32>
    %19 = tpu.iota {dimensions = array<i32: 0>} : vector<8x4xi32>
    %c0_i32 = arith.constant 0 : i32
    %20 = vector.broadcast %c0_i32 : i32 to vector<8x4xi32>
    %21 = arith.cmpi eq, %19, %20 : vector<8x4xi32>
    %cst_13 = arith.constant 0.000000e+00 : f32
    %22 = vector.shape_cast %18 : vector<1x4xf32> to vector<1x4xf32>
    %23 = vector.broadcast %22 : vector<1x4xf32> to vector<8x4xf32>
    %24 = vector.broadcast %cst_13 : f32 to vector<8x4xf32>
    %25 = arith.select %21, %23, %24 : vector<8x4xi1>, vector<8x4xf32>
    %c0_14 = arith.constant 0 : index
    %c0_15 = arith.constant 0 : index
    %c0_16 = arith.constant 0 : index
    %c0_17 = arith.constant 0 : index
    %26 = vector.load %arg7[%c0_14, %c0_15, %c0_16, %c0_17] : memref<1x1x8x4xf32, #tpu.memory_space<vmem>>, vector<1x1x8x4xf32>
    %27 = vector.shape_cast %26 : vector<1x1x8x4xf32> to vector<8x4xf32>
    %28 = vector.shape_cast %25 : vector<8x4xf32> to vector<1x1x8x4xf32>
    tpu.vector_store %arg7[%c0_14, %c0_15, %c0_16, %c0_17], %28 {strides = array<i32>} : memref<1x1x8x4xf32, #tpu.memory_space<vmem>>, vector<1x1x8x4xf32>,
    return
  }
  func.func @transform_0(%arg0: i32, %arg1: i32) -> (i32, i32, i32) {
    %c0_i32 = arith.constant 0 : i32
    %c0_i32_0 = arith.constant 0 : i32
    return %arg0, %arg1, %c0_i32 : i32, i32, i32
  }
  func.func @transform_1(%arg0: i32, %arg1: i32) -> (i32, i32) {
    %c0_i32 = arith.constant 0 : i32
    %c0_i32_0 = arith.constant 0 : i32
    %c0_i32_1 = arith.constant 0 : i32
    return %c0_i32, %c0_i32_0 : i32, i32
  }
  func.func @transform_2(%arg0: i32, %arg1: i32) -> (i32, i32) {
    %c0_i32 = arith.constant 0 : i32
    %c0_i32_0 = arith.constant 0 : i32
    %c0_i32_1 = arith.constant 0 : i32
    return %c0_i32, %c0_i32_0 : i32, i32
  }
  func.func @transform_3(%arg0: i32, %arg1: i32) -> (i32, i32) {
    %c0_i32 = arith.constant 0 : i32
    %c0_i32_0 = arith.constant 0 : i32
    %c0_i32_1 = arith.constant 0 : i32
    return %c0_i32, %c0_i32_0 : i32, i32
  }
  func.func @transform_4(%arg0: i32, %arg1: i32) -> (i32, i32, i32) {
    %c0_i32 = arith.constant 0 : i32
    %c0_i32_0 = arith.constant 0 : i32
    return %arg0, %arg1, %c0_i32 : i32, i32, i32
  }
  func.func @transform_5(%arg0: i32, %arg1: i32) -> (i32, i32, i32, i32) {
    %c0_i32 = arith.constant 0 : i32
    %c0_i32_0 = arith.constant 0 : i32
    %c0_i32_1 = arith.constant 0 : i32
    return %arg0, %arg1, %c0_i32, %c0_i32_0 : i32, i32, i32, i32
  }
}

</mosaic_0001>

<llo_original>
// kernel: tpu_custom_call.1
$region0: #{tpu_custom_call.1}
  #allocation0 [shape = 'u32[]', space=smem, size = 0x4, offset = 0x4, fixed_abs, tag = 'smem constant byte address 0x4 - core index']
  #allocation1 [shape = 'u32[144,128]{1,0:T(1,128)}', space=vmem, size = 0x12000, scoped, tag = 'internal scratch']
  %s0 = inlined_call_operand.vmem [shape: bf16[2,256,4], index: 0, kind: input, shape index: {}]
  %s1 = inlined_call_operand.vmem [shape: bf16[4,8], index: 1, kind: input, shape index: {}]
  %s2 = inlined_call_operand.vmem [shape: f32[1,8], index: 2, kind: input, shape index: {}]
  %s3 = inlined_call_operand.vmem [shape: f32[1,8], index: 3, kind: input, shape index: {}]
  %s4 = inlined_call_operand.vmem [shape: bf16[2,256,8], index: 4, kind: output, shape index: {0}]
  %s5 = inlined_call_operand.vmem [shape: f32[2,1,8,4], index: 5, kind: output, shape index: {1}]
  %6 = xla_tuple %s4, %s5
  %s7 = sld [smem:[#allocation0]]
  $region57: #{tpu_custom_call.1} parent=0
    _
  %s9 = ssub.s32 1, %s7
  %s10 = scalar_select 0, %s9, %s7
  loop: start=0, step=1, limit=4
  $region2: #{tpu_custom_call.1} parent=0 // loop_pre_header
    _
  $region3: #{tpu_custom_call.1} parent=0 // loop_header
    %s12 = sphi 0, %s16
    %p13 = scmp.ge.s32.totalorder %s12, 4
    %s19 = sphi 0, %s31
    %s20 = sphi 0, %s27
    %s21 = sphi 0, %s19
    %s22 = sphi 0, %s20
    %s23 = sphi 0, %s21
    %s24 = sphi 0, %s22
    %s36 = sphi 0, %s38
    %s39 = sphi 0, %s36
    %s40 = sphi 0, %s39
    %s56 = sphi 0, %s40
    %s60 = sphi 0, %s60
    %s62 = sphi 0, %s60
    %s63 = sphi 0, %s62
    %s77 = sphi 0, %s63
    %s81 = sphi 0, %s81
    %s83 = sphi 0, %s81
    %s84 = sphi 0, %s83
    %s98 = sphi 0, %s84
    %s102 = sphi 0, %s102
    %s104 = sphi 0, %s102
    %s105 = sphi 0, %s104
    %s119 = sphi 0, %s105
    %s127 = sphi 0, %s129
    %s130 = sphi 0, %s127
    %s131 = sphi 0, %s130
    %s147 = sphi 0, %s131
    %s155 = sphi 0, %s157
    %s158 = sphi 0, %s155
    %s159 = sphi 0, %s158
    %s175 = sphi 0, %s159
  $region4: #{tpu_custom_call.1} parent=0 // loop_header_branch
    %15 = sbr.rel (%p13) target = $region8
  $region5: #{tpu_custom_call.1} parent=0 // loop_body
    %s17 = ssub.s32 %s12, 1
    %s18 = ssub.s32 %s12, 2
    %s25 = sadd.s32 1, %s20
    %p26 = scmp.ge.s32.totalorder %s25, 1
    %s27 = scalar_select %p26, 0, %s25
    %s28 = sadd.s32 1, %s19
    %s29 = scalar_select %p26, %s28, %s19
    %p30 = scmp.ge.s32.totalorder %s29, 2
    %s31 = scalar_select %p30, 0, %s29
    %s32 = ssub.s32 %s19, %s31
    %s33 = ssub.s32 %s20, %s27
    %s34 = sor.u32 %s32, %s33
    %p35 = scmp.eq.s32.totalorder %s34, 0
    %s37 = sadd.s32 %s36, 1
    %s38 = scalar_select %p35, %s36, %s37
    %p41 = pneg %p35
    %p42 = scmp.eq.s32.totalorder %s12, 1
    %p43 = por %p41, %p42
    %p44 = scmp.ne.s32.totalorder %s36, %s39
    %p45 = scmp.eq.s32.totalorder %s12, 0
    %p46 = por %p44, %p45
    %p47 = scmp.ne.s32.totalorder %s36, %s39
    %p48 = scmp.eq.s32.totalorder %s17, 1
    %p49 = por %p47, %p48
    %p50 = scmp.ne.s32.totalorder %s39, %s40
    %p51 = scmp.eq.s32.totalorder %s17, 0
    %p52 = por %p50, %p51
    %p53 = scmp.ne.s32.totalorder %s39, %s40
    %p54 = scmp.eq.s32.totalorder %s18, 1
    %p55 = por %p53, %p54
    %p57 = scmp.ne.s32.totalorder %s40, %s56
    %p58 = scmp.eq.s32.totalorder %s18, 0
    %p59 = por %p57, %p58
    %s61 = sadd.s32 %s60, 1
    %p64 = scmp.eq.s32.totalorder %s12, 1
    %p65 = scmp.ne.s32.totalorder %s60, %s62
    %p66 = scmp.eq.s32.totalorder %s12, 0
    %p67 = por %p65, %p66
    %p68 = scmp.ne.s32.totalorder %s60, %s62
    %p69 = scmp.eq.s32.totalorder %s17, 1
    %p70 = por %p68, %p69
    %p71 = scmp.ne.s32.totalorder %s62, %s63
    %p72 = scmp.eq.s32.totalorder %s17, 0
    %p73 = por %p71, %p72
    %p74 = scmp.ne.s32.totalorder %s62, %s63
    %p75 = scmp.eq.s32.totalorder %s18, 1
    %p76 = por %p74, %p75
    %p78 = scmp.ne.s32.totalorder %s63, %s77
    %p79 = scmp.eq.s32.totalorder %s18, 0
    %p80 = por %p78, %p79
    %s82 = sadd.s32 %s81, 1
    %p85 = scmp.eq.s32.totalorder %s12, 1
    %p86 = scmp.ne.s32.totalorder %s81, %s83
    %p87 = scmp.eq.s32.totalorder %s12, 0
    %p88 = por %p86, %p87
    %p89 = scmp.ne.s32.totalorder %s81, %s83
    %p90 = scmp.eq.s32.totalorder %s17, 1
    %p91 = por %p89, %p90
    %p92 = scmp.ne.s32.totalorder %s83, %s84
    %p93 = scmp.eq.s32.totalorder %s17, 0
    %p94 = por %p92, %p93
    %p95 = scmp.ne.s32.totalorder %s83, %s84
    %p96 = scmp.eq.s32.totalorder %s18, 1
    %p97 = por %p95, %p96
    %p99 = scmp.ne.s32.totalorder %s84, %s98
    %p100 = scmp.eq.s32.totalorder %s18, 0
    %p101 = por %p99, %p100
    %s103 = sadd.s32 %s102, 1
    %p106 = scmp.eq.s32.totalorder %s12, 1
    %p107 = scmp.ne.s32.totalorder %s102, %s104
    %p108 = scmp.eq.s32.totalorder %s12, 0
    %p109 = por %p107, %p108
    %p110 = scmp.ne.s32.totalorder %s102, %s104
    %p111 = scmp.eq.s32.totalorder %s17, 1
    %p112 = por %p110, %p111
    %p113 = scmp.ne.s32.totalorder %s104, %s105
    %p114 = scmp.eq.s32.totalorder %s17, 0
    %p115 = por %p113, %p114
    %p116 = scmp.ne.s32.totalorder %s104, %s105
    %p117 = scmp.eq.s32.totalorder %s18, 1
    %p118 = por %p116, %p117
    %p120 = scmp.ne.s32.totalorder %s105, %s119
    %p121 = scmp.eq.s32.totalorder %s18, 0
    %p122 = por %p120, %p121
    %s123 = ssub.s32 %s19, %s31
    %s124 = ssub.s32 %s20, %s27
    %s125 = sor.u32 %s123, %s124
    %p126 = scmp.eq.s32.totalorder %s125, 0
    %s128 = sadd.s32 %s127, 1
    %s129 = scalar_select %p126, %s127, %s128
    %p132 = pneg %p126
    %p133 = scmp.eq.s32.totalorder %s12, 1
    %p134 = por %p132, %p133
    %p135 = scmp.ne.s32.totalorder %s127, %s130
    %p136 = scmp.eq.s32.totalorder %s12, 0
    %p137 = por %p135, %p136
    %p138 = scmp.ne.s32.totalorder %s127, %s130
    %p139 = scmp.eq.s32.totalorder %s17, 1
    %p140 = por %p138, %p139
    %p141 = scmp.ne.s32.totalorder %s130, %s131
    %p142 = scmp.eq.s32.totalorder %s17, 0
    %p143 = por %p141, %p142
    %p144 = scmp.ne.s32.totalorder %s130, %s131
    %p145 = scmp.eq.s32.totalorder %s18, 1
    %p146 = por %p144, %p145
    %p148 = scmp.ne.s32.totalorder %s131, %s147
    %p149 = scmp.eq.s32.totalorder %s18, 0
    %p150 = por %p148, %p149
    %s151 = ssub.s32 %s19, %s31
    %s152 = ssub.s32 %s20, %s27
    %s153 = sor.u32 %s151, %s152
    %p154 = scmp.eq.s32.totalorder %s153, 0
    %s156 = sadd.s32 %s155, 1
    %s157 = scalar_select %p154, %s155, %s156
    %p160 = pneg %p154
    %p161 = scmp.eq.s32.totalorder %s12, 1
    %p162 = por %p160, %p161
    %p163 = scmp.ne.s32.totalorder %s155, %s158
    %p164 = scmp.eq.s32.totalorder %s12, 0
    %p165 = por %p163, %p164
    %p166 = scmp.ne.s32.totalorder %s155, %s158
    %p167 = scmp.eq.s32.totalorder %s17, 1
    %p168 = por %p166, %p167
    %p169 = scmp.ne.s32.totalorder %s158, %s159
    %p170 = scmp.eq.s32.totalorder %s17, 0
    %p171 = por %p169, %p170
    %p172 = scmp.ne.s32.totalorder %s158, %s159
    %p173 = scmp.eq.s32.totalorder %s18, 1
    %p174 = por %p172, %p173
    %p176 = scmp.ne.s32.totalorder %s159, %s175
    %p177 = scmp.eq.s32.totalorder %s18, 0
    %p178 = por %p176, %p177
    %p179 = scmp.le.s32.totalorder 1, %s12
    %p180 = scmp.lt.s32.totalorder %s12, 3
    %p181 = pnand %p179, %p180
    %p182 = pneg %p181
    // Predicated region
    $region9: #{tpu_custom_call.1} parent=5 // pred_check
      _
    $region10: #{tpu_custom_call.1} parent=5 // pred_check_branch
      %184 = sbr.rel (%p181) target = $region12
    $region11: #{tpu_custom_call.1} parent=5 // pred_region
      %s185 = ssub.s32 %s12, 1
      // Predicated region
      $region13: #{tpu_custom_call.1} parent=11 // pred_check
        %p186 = pneg %p73
      $region14: #{tpu_custom_call.1} parent=11 // pred_check_branch
        %188 = sbr.rel (%p186) target = $region16
      $region15: #{tpu_custom_call.1} parent=11 // pred_region
        _
      $region16: #{tpu_custom_call.1} parent=11 // pred_fallthru
        _
      // Predicated region
      $region17: #{tpu_custom_call.1} parent=11 // pred_check
        %p189 = pneg %p94
      $region18: #{tpu_custom_call.1} parent=11 // pred_check_branch
        %191 = sbr.rel (%p189) target = $region20
      $region19: #{tpu_custom_call.1} parent=11 // pred_region
        _
      $region20: #{tpu_custom_call.1} parent=11 // pred_fallthru
        _
      // Predicated region
      $region21: #{tpu_custom_call.1} parent=11 // pred_check
        %p192 = pneg %p115
      $region22: #{tpu_custom_call.1} parent=11 // pred_check_branch
        %194 = sbr.rel (%p192) target = $region24
      $region23: #{tpu_custom_call.1} parent=11 // pred_region
        _
      $region24: #{tpu_custom_call.1} parent=11 // pred_fallthru
        _
    $region12: #{tpu_custom_call.1} parent=5 // pred_fallthru
      _
    %p195 = scmp.lt.s32.totalorder %s12, 2
    // Predicated region
    $region25: #{tpu_custom_call.1} parent=5 // pred_check
      %p196 = pneg %p195
    $region26: #{tpu_custom_call.1} parent=5 // pred_check_branch
      %198 = sbr.rel (%p196) target = $region28
    $region27: #{tpu_custom_call.1} parent=5 // pred_region
      // Predicated region
      $region29: #{tpu_custom_call.1} parent=27 // pred_check
        %p199 = pneg %p46
      $region30: #{tpu_custom_call.1} parent=27 // pred_check_branch
        %201 = sbr.rel (%p199) target = $region32
      $region31: #{tpu_custom_call.1} parent=27 // pred_region
        %s202 = smul.u32 32, %s20
        %p203 = scmp.lt.s32.totalorder %s19, 1
        %s204 = scalar_select %p203, %s19, 1
        %p205 = scmp.lt.s32.totalorder %s202, 31
        %s206 = scalar_select %p205, %s202, 31
        %s207 = smul.addr %s204, 32
        %s208 = sadd.s32 %s206, %s207
        %s209 = smul.addr %s208, 4
        %s210 = scalar_lea.vmem %s0, %s209
        %s211 = smul.u32 32, %s20
      $region32: #{tpu_custom_call.1} parent=27 // pred_fallthru
        _
    $region28: #{tpu_custom_call.1} parent=5 // pred_fallthru
      _
    %p212 = scmp.le.s32.totalorder 1, %s12
    %p213 = scmp.lt.s32.totalorder %s12, 3
    %p214 = pnand %p212, %p213
    %p215 = pneg %p214
    // Predicated region
    $region33: #{tpu_custom_call.1} parent=5 // pred_check
      _
    $region34: #{tpu_custom_call.1} parent=5 // pred_check_branch
      %217 = sbr.rel (%p214) target = $region36
    $region35: #{tpu_custom_call.1} parent=5 // pred_region
      %s218 = ssub.s32 %s12, 1
      %s219 = smul.u32 32, %s22
      %p220 = scmp.lt.s32.totalorder %s21, 1
      %s221 = scalar_select %p220, %s21, 1
      %p222 = scmp.lt.s32.totalorder %s219, 31
      %s223 = scalar_select %p222, %s219, 31
      %s224 = smul.addr %s221, 32
      %s225 = sadd.s32 %s223, %s224
      %s226 = smul.addr %s225, 4
      %s227 = scalar_lea.vmem %s0, %s226
      %p228 = pneg %p52
      %p229 = pneg %p49
      %p230 = pneg %p73
      %p231 = pneg %p70
      %p232 = pneg %p94
      %p233 = pneg %p91
      %p234 = pneg %p115
      %p235 = pneg %p112
      %p236 = pneg %p143
      %p237 = pneg %p140
      %s238 = smul.u32 32, %s22
      %p239 = scmp.lt.s32.totalorder %s21, 1
      %s240 = scalar_select %p239, %s21, 1
      %p241 = scmp.lt.s32.totalorder %s238, 31
      %s242 = scalar_select %p241, %s238, 31
      %s243 = smul.addr %s240, 32
      %s244 = sadd.s32 %s242, %s243
      %s245 = smul.addr %s244, 4
      %s246 = scalar_lea.vmem %s4, %s245
      %p247 = pneg %p171
      %p248 = pneg %p168
      %p249 = scmp.lt.s32.totalorder %s21, 1
      %s250 = scalar_select %p249, %s21, 1
      %p251 = scmp.lt.s32.totalorder %s22, 0
      %s252 = scalar_select %p251, %s22, 0
      %s253 = sadd.s32 %s252, %s250
      %s254 = smul.addr %s253, 8
      %s255 = scalar_lea.vmem %s5, %s254
      %s256 = smul.u32 32, %s22
      %p257 = scmp.lt.s32.totalorder %s21, 1
      %s258 = scalar_select %p257, %s21, 1
      %p259 = scmp.lt.s32.totalorder %s256, 31
      %s260 = scalar_select %p259, %s256, 31
      %s261 = smul.addr %s258, 32
      %s262 = sadd.s32 %s260, %s261
      %s263 = smul.addr %s262, 4
      %s264 = scalar_lea.vmem %s0, %s263
      %s265 = smul.u32 32, %s22
      %s266 = smul.u32 32, %s22
      %p267 = scmp.lt.s32.totalorder %s21, 1
      %s268 = scalar_select %p267, %s21, 1
      %p269 = scmp.lt.s32.totalorder %s266, 31
      %s270 = scalar_select %p269, %s266, 31
      %s271 = smul.addr %s268, 32
      %s272 = sadd.s32 %s270, %s271
      %s273 = smul.addr %s272, 4
      %s274 = scalar_lea.vmem %s4, %s273
      %s275 = smul.u32 32, %s22
      %p276 = scmp.lt.s32.totalorder %s21, 1
      %s277 = scalar_select %p276, %s21, 1
      %p278 = scmp.lt.s32.totalorder %s22, 0
      %s279 = scalar_select %p278, %s22, 0
      %s280 = sadd.s32 %s279, %s277
      %s281 = smul.addr %s280, 8
      %s282 = scalar_lea.vmem %s5, %s281
      %v284 = vld [vmem:[%s264] sm:$0xf]
      %v285 = vld [vmem:[%s264 + $0x4] sm:$0xf]
      %v286 = vld [vmem:[%s264 + $0x8] sm:$0xf]
      %v287 = vld [vmem:[%s264 + $0xc] sm:$0xf]
      %v288 = vld [vmem:[%s264 + $0x10] sm:$0xf]
      %v289 = vld [vmem:[%s264 + $0x14] sm:$0xf]
      %v290 = vld [vmem:[%s264 + $0x18] sm:$0xf]
      %v291 = vld [vmem:[%s264 + $0x1c] sm:$0xf]
      %v292 = vld [vmem:[%s264 + $0x20] sm:$0xf]
      %v293 = vld [vmem:[%s264 + $0x24] sm:$0xf]
      %v294 = vld [vmem:[%s264 + $0x28] sm:$0xf]
      %v295 = vld [vmem:[%s264 + $0x2c] sm:$0xf]
      %v296 = vld [vmem:[%s264 + $0x30] sm:$0xf]
      %v297 = vld [vmem:[%s264 + $0x34] sm:$0xf]
      %v298 = vld [vmem:[%s264 + $0x38] sm:$0xf]
      %v299 = vld [vmem:[%s264 + $0x3c] sm:$0xf]
      %v300 = vld [vmem:[%s264 + $0x40] sm:$0xf]
      %v301 = vld [vmem:[%s264 + $0x44] sm:$0xf]
      %v302 = vld [vmem:[%s264 + $0x48] sm:$0xf]
      %v303 = vld [vmem:[%s264 + $0x4c] sm:$0xf]
      %v304 = vld [vmem:[%s264 + $0x50] sm:$0xf]
      %v305 = vld [vmem:[%s264 + $0x54] sm:$0xf]
      %v306 = vld [vmem:[%s264 + $0x58] sm:$0xf]
      %v307 = vld [vmem:[%s264 + $0x5c] sm:$0xf]
      %v308 = vld [vmem:[%s264 + $0x60] sm:$0xf]
      %v309 = vld [vmem:[%s264 + $0x64] sm:$0xf]
      %v310 = vld [vmem:[%s264 + $0x68] sm:$0xf]
      %v311 = vld [vmem:[%s264 + $0x6c] sm:$0xf]
      %v312 = vld [vmem:[%s264 + $0x70] sm:$0xf]
      %v313 = vld [vmem:[%s264 + $0x74] sm:$0xf]
      %v314 = vld [vmem:[%s264 + $0x78] sm:$0xf]
      %v315 = vld [vmem:[%s264 + $0x7c] sm:$0xf]
      %v316 = vld [vmem:[%s1] sm:$0x3]
      %v349 = vunpack.c.l.b16 %v284
      %v350 = vunpack.c.l.b16 %v285
      %v351 = vunpack.c.l.b16 %v286
      %v352 = vunpack.c.l.b16 %v287
      %v353 = vunpack.c.l.b16 %v288
      %v354 = vunpack.c.l.b16 %v289
      %v355 = vunpack.c.l.b16 %v290
      %v356 = vunpack.c.l.b16 %v291
      %v357 = vunpack.c.l.b16 %v292
      %v358 = vunpack.c.l.b16 %v293
      %v359 = vunpack.c.l.b16 %v294
      %v360 = vunpack.c.l.b16 %v295
      %v361 = vunpack.c.l.b16 %v296
      %v362 = vunpack.c.l.b16 %v297
      %v363 = vunpack.c.l.b16 %v298
      %v364 = vunpack.c.l.b16 %v299
      %v365 = vunpack.c.l.b16 %v300
      %v366 = vunpack.c.l.b16 %v301
      %v367 = vunpack.c.l.b16 %v302
      %v368 = vunpack.c.l.b16 %v303
      %v369 = vunpack.c.l.b16 %v304
      %v370 = vunpack.c.l.b16 %v305
      %v371 = vunpack.c.l.b16 %v306
      %v372 = vunpack.c.l.b16 %v307
      %v373 = vunpack.c.l.b16 %v308
      %v374 = vunpack.c.l.b16 %v309
      %v375 = vunpack.c.l.b16 %v310
      %v376 = vunpack.c.l.b16 %v311
      %v377 = vunpack.c.l.b16 %v312
      %v378 = vunpack.c.l.b16 %v313
      %v379 = vunpack.c.l.b16 %v314
      %v380 = vunpack.c.l.b16 %v315
      %v381 = vpack.c.b16 %v350, %v349
      %v382 = vpack.c.b16 %v352, %v351
      %v383 = vpack.c.b16 %v354, %v353
      %v384 = vpack.c.b16 %v356, %v355
      %v385 = vpack.c.b16 %v358, %v357
      %v386 = vpack.c.b16 %v360, %v359
      %v387 = vpack.c.b16 %v362, %v361
      %v388 = vpack.c.b16 %v364, %v363
      %v389 = vpack.c.b16 %v366, %v365
      %v390 = vpack.c.b16 %v368, %v367
      %v391 = vpack.c.b16 %v370, %v369
      %v392 = vpack.c.b16 %v372, %v371
      %v393 = vpack.c.b16 %v374, %v373
      %v394 = vpack.c.b16 %v376, %v375
      %v395 = vpack.c.b16 %v378, %v377
      %v396 = vpack.c.b16 %v380, %v379
      %vm397 = vcmask 31744
      %v399 = vsel %vm397, %v381, 0
      %v402 = vsel %vm397, %v382, 0
      %v405 = vsel %vm397, %v383, 0
      %v408 = vsel %vm397, %v384, 0
      %v411 = vsel %vm397, %v385, 0
      %v414 = vsel %vm397, %v386, 0
      %v417 = vsel %vm397, %v387, 0
      %v420 = vsel %vm397, %v388, 0
      %v423 = vsel %vm397, %v389, 0
      %v426 = vsel %vm397, %v390, 0
      %v429 = vsel %vm397, %v391, 0
      %v432 = vsel %vm397, %v392, 0
      %v435 = vsel %vm397, %v393, 0
      %v438 = vsel %vm397, %v394, 0
      %v441 = vsel %vm397, %v395, 0
      %v444 = vsel %vm397, %v396, 0
      %vm446 = vcmask 1041408
      %v448 = vsel %vm446, %v316, 0
      %450 = vmatprep.subr.bf16.mxu0 0
      %451 = vmatpush1.bf16.msra.mxu0 0
      %452 = vmatprep.subr.bf16.mxu0 0
      %453 = vmatpush1.bf16.msra.mxu0 0
      %454 = vmatprep.subr.bf16.mxu0 0
      %455 = vmatpush1.bf16.msra.mxu0 0
      %456 = vmatprep.subr.bf16.mxu0 0
      %457 = vmatpush1.bf16.msra.mxu0 0
      %458 = vmatprep.subr.bf16.mxu0 0
      %459 = vmatpush1.bf16.msra.mxu0 0
      %460 = vmatprep.subr.bf16.mxu0 0
      %461 = vmatpush1.bf16.msra.mxu0 0
      %462 = vmatprep.subr.bf16.mxu0 0
      %463 = vmatpush1.bf16.msra.mxu0 0
      %464 = vmatprep.subr.bf16.mxu0 0
      %465 = vmatpush1.bf16.msra.mxu0 %v448
      %466 = vmatprep.subr.bf16.mxu0 0
      %467 = vmatpush2.bf16.msra.mxu0 0
      %468 = vmatprep.subr.bf16.mxu0 0
      %469 = vmatpush2.bf16.msra.mxu0 0
      %470 = vmatprep.subr.bf16.mxu0 0
      %471 = vmatpush2.bf16.msra.mxu0 0
      %472 = vmatprep.subr.bf16.mxu0 0
      %473 = vmatpush2.bf16.msra.mxu0 0
      %474 = vmatprep.subr.bf16.mxu0 0
      %475 = vmatpush2.bf16.msra.mxu0 0
      %476 = vmatprep.subr.bf16.mxu0 0
      %477 = vmatpush2.bf16.msra.mxu0 0
      %478 = vmatprep.subr.bf16.mxu0 0
      %479 = vmatpush2.bf16.msra.mxu0 0
      %480 = vmatprep.subr.bf16.mxu0 0
      %481 = vmatpush2.bf16.msra.mxu0 0
      %482 = vmatprep.mubr.bf16.mxu0 0
      %483 = vmatmul.mubr.bf16.gmra.mxu0 %v399
      %v484 = vpop.f32.mrf.mxu0
      %v485 = vadd.f32 0.0, %v484
      %v486 = vpop.f32.mrf.mxu0
      %v487 = vpop.f32.mrf.mxu0
      %v488 = vadd.f32 0.0, %v487
      %v489 = vpop.f32.mrf.mxu0
      %490 = vmatprep.mubr.bf16.mxu0 0
      %491 = vmatmul.mubr.bf16.gmra.mxu0 %v402
      %v492 = vpop.f32.mrf.mxu0
      %v493 = vadd.f32 0.0, %v492
      %v494 = vpop.f32.mrf.mxu0
      %v495 = vpop.f32.mrf.mxu0
      %v496 = vadd.f32 0.0, %v495
      %v497 = vpop.f32.mrf.mxu0
      %498 = vmatprep.mubr.bf16.mxu0 0
      %499 = vmatmul.mubr.bf16.gmra.mxu0 %v405
      %v500 = vpop.f32.mrf.mxu0
      %v501 = vadd.f32 0.0, %v500
      %v502 = vpop.f32.mrf.mxu0
      %v503 = vpop.f32.mrf.mxu0
      %v504 = vadd.f32 0.0, %v503
      %v505 = vpop.f32.mrf.mxu0
      %506 = vmatprep.mubr.bf16.mxu0 0
      %507 = vmatmul.mubr.bf16.gmra.mxu0 %v408
      %v508 = vpop.f32.mrf.mxu0
      %v509 = vadd.f32 0.0, %v508
      %v510 = vpop.f32.mrf.mxu0
      %v511 = vpop.f32.mrf.mxu0
      %v512 = vadd.f32 0.0, %v511
      %v513 = vpop.f32.mrf.mxu0
      %514 = vmatprep.mubr.bf16.mxu0 0
      %515 = vmatmul.mubr.bf16.gmra.mxu0 %v411
      %v516 = vpop.f32.mrf.mxu0
      %v517 = vadd.f32 0.0, %v516
      %v518 = vpop.f32.mrf.mxu0
      %v519 = vpop.f32.mrf.mxu0
      %v520 = vadd.f32 0.0, %v519
      %v521 = vpop.f32.mrf.mxu0
      %522 = vmatprep.mubr.bf16.mxu0 0
      %523 = vmatmul.mubr.bf16.gmra.mxu0 %v414
      %v524 = vpop.f32.mrf.mxu0
      %v525 = vadd.f32 0.0, %v524
      %v526 = vpop.f32.mrf.mxu0
      %v527 = vpop.f32.mrf.mxu0
      %v528 = vadd.f32 0.0, %v527
      %v529 = vpop.f32.mrf.mxu0
      %530 = vmatprep.mubr.bf16.mxu0 0
      %531 = vmatmul.mubr.bf16.gmra.mxu0 %v417
      %v532 = vpop.f32.mrf.mxu0
      %v533 = vadd.f32 0.0, %v532
      %v534 = vpop.f32.mrf.mxu0
      %v535 = vpop.f32.mrf.mxu0
      %v536 = vadd.f32 0.0, %v535
      %v537 = vpop.f32.mrf.mxu0
      %538 = vmatprep.mubr.bf16.mxu0 0
      %539 = vmatmul.mubr.bf16.gmra.mxu0 %v420
      %v540 = vpop.f32.mrf.mxu0
      %v541 = vadd.f32 0.0, %v540
      %v542 = vpop.f32.mrf.mxu0
      %v543 = vpop.f32.mrf.mxu0
      %v544 = vadd.f32 0.0, %v543
      %v545 = vpop.f32.mrf.mxu0
      %546 = vmatprep.mubr.bf16.mxu0 0
      %547 = vmatmul.mubr.bf16.gmra.mxu0 %v423
      %v548 = vpop.f32.mrf.mxu0
      %v549 = vadd.f32 0.0, %v548
      %v550 = vpop.f32.mrf.mxu0
      %v551 = vpop.f32.mrf.mxu0
      %v552 = vadd.f32 0.0, %v551
      %v553 = vpop.f32.mrf.mxu0
      %554 = vmatprep.mubr.bf16.mxu0 0
      %555 = vmatmul.mubr.bf16.gmra.mxu0 %v426
      %v556 = vpop.f32.mrf.mxu0
      %v557 = vadd.f32 0.0, %v556
      %v558 = vpop.f32.mrf.mxu0
      %v559 = vpop.f32.mrf.mxu0
      %v560 = vadd.f32 0.0, %v559
      %v561 = vpop.f32.mrf.mxu0
      %562 = vmatprep.mubr.bf16.mxu0 0
      %563 = vmatmul.mubr.bf16.gmra.mxu0 %v429
      %v564 = vpop.f32.mrf.mxu0
      %v565 = vadd.f32 0.0, %v564
      %v566 = vpop.f32.mrf.mxu0
      %v567 = vpop.f32.mrf.mxu0
      %v568 = vadd.f32 0.0, %v567
      %v569 = vpop.f32.mrf.mxu0
      %570 = vmatprep.mubr.bf16.mxu0 0
      %571 = vmatmul.mubr.bf16.gmra.mxu0 %v432
      %v572 = vpop.f32.mrf.mxu0
      %v573 = vadd.f32 0.0, %v572
      %v574 = vpop.f32.mrf.mxu0
      %v575 = vpop.f32.mrf.mxu0
      %v576 = vadd.f32 0.0, %v575
      %v577 = vpop.f32.mrf.mxu0
      %578 = vmatprep.mubr.bf16.mxu0 0
      %579 = vmatmul.mubr.bf16.gmra.mxu0 %v435
      %v580 = vpop.f32.mrf.mxu0
      %v581 = vadd.f32 0.0, %v580
      %v582 = vpop.f32.mrf.mxu0
      %v583 = vpop.f32.mrf.mxu0
      %v584 = vadd.f32 0.0, %v583
      %v585 = vpop.f32.mrf.mxu0
      %586 = vmatprep.mubr.bf16.mxu0 0
      %587 = vmatmul.mubr.bf16.gmra.mxu0 %v438
      %v588 = vpop.f32.mrf.mxu0
      %v589 = vadd.f32 0.0, %v588
      %v590 = vpop.f32.mrf.mxu0
      %v591 = vpop.f32.mrf.mxu0
      %v592 = vadd.f32 0.0, %v591
      %v593 = vpop.f32.mrf.mxu0
      %594 = vmatprep.mubr.bf16.mxu0 0
      %595 = vmatmul.mubr.bf16.gmra.mxu0 %v441
      %v596 = vpop.f32.mrf.mxu0
      %v597 = vadd.f32 0.0, %v596
      %v598 = vpop.f32.mrf.mxu0
      %v599 = vpop.f32.mrf.mxu0
      %v600 = vadd.f32 0.0, %v599
      %v601 = vpop.f32.mrf.mxu0
      %602 = vmatprep.mubr.bf16.mxu0 0
      %603 = vmatmul.mubr.bf16.gmra.mxu0 %v444
      %v604 = vpop.f32.mrf.mxu0
      %v605 = vadd.f32 0.0, %v604
      %v606 = vpop.f32.mrf.mxu0
      %v607 = vpop.f32.mrf.mxu0
      %v608 = vadd.f32 0.0, %v607
      %v609 = vpop.f32.mrf.mxu0
      %610 = vdwg.mxu0
      %v611 = vld [vmem:[%s2] sm:$0x1]
      %v613 = vlaneseq
      %v614 = vshrl.u32 %v613, 7
      %v615 = vsub.s32 0, %v614
      %v616 = vrot.slane %v611, %v615
      %v618 = vmul.f32 %v485, %v616
      %v619 = vmul.f32 %v488, %v616
      %v620 = vmul.f32 %v493, %v616
      %v621 = vmul.f32 %v496, %v616
      %v622 = vmul.f32 %v501, %v616
      %v623 = vmul.f32 %v504, %v616
      %v624 = vmul.f32 %v509, %v616
      %v625 = vmul.f32 %v512, %v616
      %v626 = vmul.f32 %v517, %v616
      %v627 = vmul.f32 %v520, %v616
      %v628 = vmul.f32 %v525, %v616
      %v629 = vmul.f32 %v528, %v616
      %v630 = vmul.f32 %v533, %v616
      %v631 = vmul.f32 %v536, %v616
      %v632 = vmul.f32 %v541, %v616
      %v633 = vmul.f32 %v544, %v616
      %v634 = vmul.f32 %v549, %v616
      %v635 = vmul.f32 %v552, %v616
      %v636 = vmul.f32 %v557, %v616
      %v637 = vmul.f32 %v560, %v616
      %v638 = vmul.f32 %v565, %v616
      %v639 = vmul.f32 %v568, %v616
      %v640 = vmul.f32 %v573, %v616
      %v641 = vmul.f32 %v576, %v616
      %v642 = vmul.f32 %v581, %v616
      %v643 = vmul.f32 %v584, %v616
      %v644 = vmul.f32 %v589, %v616
      %v645 = vmul.f32 %v592, %v616
      %v646 = vmul.f32 %v597, %v616
      %v647 = vmul.f32 %v600, %v616
      %v648 = vmul.f32 %v605, %v616
      %v649 = vmul.f32 %v608, %v616
      %v650 = vld [vmem:[%s3] sm:$0x1]
      %v652 = vlaneseq
      %v653 = vshrl.u32 %v652, 7
      %v654 = vsub.s32 0, %v653
      %v655 = vrot.slane %v650, %v654
      %v657 = vadd.f32 %v618, %v655
      %v658 = vadd.f32 %v619, %v655
      %v659 = vadd.f32 %v620, %v655
      %v660 = vadd.f32 %v621, %v655
      %v661 = vadd.f32 %v622, %v655
      %v662 = vadd.f32 %v623, %v655
      %v663 = vadd.f32 %v624, %v655
      %v664 = vadd.f32 %v625, %v655
      %v665 = vadd.f32 %v626, %v655
      %v666 = vadd.f32 %v627, %v655
      %v667 = vadd.f32 %v628, %v655
      %v668 = vadd.f32 %v629, %v655
      %v669 = vadd.f32 %v630, %v655
      %v670 = vadd.f32 %v631, %v655
      %v671 = vadd.f32 %v632, %v655
      %v672 = vadd.f32 %v633, %v655
      %v673 = vadd.f32 %v634, %v655
      %v674 = vadd.f32 %v635, %v655
      %v675 = vadd.f32 %v636, %v655
      %v676 = vadd.f32 %v637, %v655
      %v677 = vadd.f32 %v638, %v655
      %v678 = vadd.f32 %v639, %v655
      %v679 = vadd.f32 %v640, %v655
      %v680 = vadd.f32 %v641, %v655
      %v681 = vadd.f32 %v642, %v655
      %v682 = vadd.f32 %v643, %v655
      %v683 = vadd.f32 %v644, %v655
      %v684 = vadd.f32 %v645, %v655
      %v685 = vadd.f32 %v646, %v655
      %v686 = vadd.f32 %v647, %v655
      %v687 = vadd.f32 %v648, %v655
      %v688 = vadd.f32 %v649, %v655
      %v689 = vmax.f32 %v657, 0.0
      %v690 = vmax.f32 %v658, 0.0
      %v691 = vmax.f32 %v659, 0.0
      %v692 = vmax.f32 %v660, 0.0
      %v693 = vmax.f32 %v661, 0.0
      %v694 = vmax.f32 %v662, 0.0
      %v695 = vmax.f32 %v663, 0.0
      %v696 = vmax.f32 %v664, 0.0
      %v697 = vmax.f32 %v665, 0.0
      %v698 = vmax.f32 %v666, 0.0
      %v699 = vmax.f32 %v667, 0.0
      %v700 = vmax.f32 %v668, 0.0
      %v701 = vmax.f32 %v669, 0.0
      %v702 = vmax.f32 %v670, 0.0
      %v703 = vmax.f32 %v671, 0.0
      %v704 = vmax.f32 %v672, 0.0
      %v705 = vmax.f32 %v673, 0.0
      %v706 = vmax.f32 %v674, 0.0
      %v707 = vmax.f32 %v675, 0.0
      %v708 = vmax.f32 %v676, 0.0
      %v709 = vmax.f32 %v677, 0.0
      %v710 = vmax.f32 %v678, 0.0
      %v711 = vmax.f32 %v679, 0.0
      %v712 = vmax.f32 %v680, 0.0
      %v713 = vmax.f32 %v681, 0.0
      %v714 = vmax.f32 %v682, 0.0
      %v715 = vmax.f32 %v683, 0.0
      %v716 = vmax.f32 %v684, 0.0
      %v717 = vmax.f32 %v685, 0.0
      %v718 = vmax.f32 %v686, 0.0
      %v719 = vmax.f32 %v687, 0.0
      %v720 = vmax.f32 %v688, 0.0
      %v721 = vpack.c.bf16 %v690, %v689
      %v722 = vpack.c.bf16 %v692, %v691
      %v723 = vpack.c.bf16 %v694, %v693
      %v724 = vpack.c.bf16 %v696, %v695
      %v725 = vpack.c.bf16 %v698, %v697
      %v726 = vpack.c.bf16 %v700, %v699
      %v727 = vpack.c.bf16 %v702, %v701
      %v728 = vpack.c.bf16 %v704, %v703
      %v729 = vpack.c.bf16 %v706, %v705
      %v730 = vpack.c.bf16 %v708, %v707
      %v731 = vpack.c.bf16 %v710, %v709
      %v732 = vpack.c.bf16 %v712, %v711
      %v733 = vpack.c.bf16 %v714, %v713
      %v734 = vpack.c.bf16 %v716, %v715
      %v735 = vpack.c.bf16 %v718, %v717
      %v736 = vpack.c.bf16 %v720, %v719
      %v753 = vunpack.c.l.b16 %v721
      %v754 = vunpack.c.h.b16 %v721
      %v755 = vunpack.c.l.b16 %v722
      %v756 = vunpack.c.h.b16 %v722
      %v757 = vunpack.c.l.b16 %v723
      %v758 = vunpack.c.h.b16 %v723
      %v759 = vunpack.c.l.b16 %v724
      %v760 = vunpack.c.h.b16 %v724
      %v761 = vunpack.c.l.b16 %v725
      %v762 = vunpack.c.h.b16 %v725
      %v763 = vunpack.c.l.b16 %v726
      %v764 = vunpack.c.h.b16 %v726
      %v765 = vunpack.c.l.b16 %v727
      %v766 = vunpack.c.h.b16 %v727
      %v767 = vunpack.c.l.b16 %v728
      %v768 = vunpack.c.h.b16 %v728
      %v769 = vunpack.c.l.b16 %v729
      %v770 = vunpack.c.h.b16 %v729
      %v771 = vunpack.c.l.b16 %v730
      %v772 = vunpack.c.h.b16 %v730
      %v773 = vunpack.c.l.b16 %v731
      %v774 = vunpack.c.h.b16 %v731
      %v775 = vunpack.c.l.b16 %v732
      %v776 = vunpack.c.h.b16 %v732
      %v777 = vunpack.c.l.b16 %v733
      %v778 = vunpack.c.h.b16 %v733
      %v779 = vunpack.c.l.b16 %v734
      %v780 = vunpack.c.h.b16 %v734
      %v781 = vunpack.c.l.b16 %v735
      %v782 = vunpack.c.h.b16 %v735
      %v783 = vunpack.c.l.b16 %v736
      %v784 = vunpack.c.h.b16 %v736
      %v785 = vpack.c.b16 %v753, %v753
      %v786 = vpack.c.b16 %v754, %v754
      %v787 = vpack.c.b16 %v755, %v755
      %v788 = vpack.c.b16 %v756, %v756
      %v789 = vpack.c.b16 %v757, %v757
      %v790 = vpack.c.b16 %v758, %v758
      %v791 = vpack.c.b16 %v759, %v759
      %v792 = vpack.c.b16 %v760, %v760
      %v793 = vpack.c.b16 %v761, %v761
      %v794 = vpack.c.b16 %v762, %v762
      %v795 = vpack.c.b16 %v763, %v763
      %v796 = vpack.c.b16 %v764, %v764
      %v797 = vpack.c.b16 %v765, %v765
      %v798 = vpack.c.b16 %v766, %v766
      %v799 = vpack.c.b16 %v767, %v767
      %v800 = vpack.c.b16 %v768, %v768
      %v801 = vpack.c.b16 %v769, %v769
      %v802 = vpack.c.b16 %v770, %v770
      %v803 = vpack.c.b16 %v771, %v771
      %v804 = vpack.c.b16 %v772, %v772
      %v805 = vpack.c.b16 %v773, %v773
      %v806 = vpack.c.b16 %v774, %v774
      %v807 = vpack.c.b16 %v775, %v775
      %v808 = vpack.c.b16 %v776, %v776
      %v809 = vpack.c.b16 %v777, %v777
      %v810 = vpack.c.b16 %v778, %v778
      %v811 = vpack.c.b16 %v779, %v779
      %v812 = vpack.c.b16 %v780, %v780
      %v813 = vpack.c.b16 %v781, %v781
      %v814 = vpack.c.b16 %v782, %v782
      %v815 = vpack.c.b16 %v783, %v783
      %v816 = vpack.c.b16 %v784, %v784
      %vm849 = vcmask 60416
      %850 = vst.msk [vmem:[%s274] sm:$0xf] %vm849, %v785
      %851 = vst.msk [vmem:[%s274 + $0x4] sm:$0xf] %vm849, %v786
      %852 = vst.msk [vmem:[%s274 + $0x8] sm:$0xf] %vm849, %v787
      %853 = vst.msk [vmem:[%s274 + $0xc] sm:$0xf] %vm849, %v788
      %854 = vst.msk [vmem:[%s274 + $0x10] sm:$0xf] %vm849, %v789
      %855 = vst.msk [vmem:[%s274 + $0x14] sm:$0xf] %vm849, %v790
      %856 = vst.msk [vmem:[%s274 + $0x18] sm:$0xf] %vm849, %v791
      %857 = vst.msk [vmem:[%s274 + $0x1c] sm:$0xf] %vm849, %v792
      %858 = vst.msk [vmem:[%s274 + $0x20] sm:$0xf] %vm849, %v793
      %859 = vst.msk [vmem:[%s274 + $0x24] sm:$0xf] %vm849, %v794
      %860 = vst.msk [vmem:[%s274 + $0x28] sm:$0xf] %vm849, %v795
      %861 = vst.msk [vmem:[%s274 + $0x2c] sm:$0xf] %vm849, %v796
      %862 = vst.msk [vmem:[%s274 + $0x30] sm:$0xf] %vm849, %v797
      %863 = vst.msk [vmem:[%s274 + $0x34] sm:$0xf] %vm849, %v798
      %864 = vst.msk [vmem:[%s274 + $0x38] sm:$0xf] %vm849, %v799
      %865 = vst.msk [vmem:[%s274 + $0x3c] sm:$0xf] %vm849, %v800
      %866 = vst.msk [vmem:[%s274 + $0x40] sm:$0xf] %vm849, %v801
      %867 = vst.msk [vmem:[%s274 + $0x44] sm:$0xf] %vm849, %v802
      %868 = vst.msk [vmem:[%s274 + $0x48] sm:$0xf] %vm849, %v803
      %869 = vst.msk [vmem:[%s274 + $0x4c] sm:$0xf] %vm849, %v804
      %870 = vst.msk [vmem:[%s274 + $0x50] sm:$0xf] %vm849, %v805
      %871 = vst.msk [vmem:[%s274 + $0x54] sm:$0xf] %vm849, %v806
      %872 = vst.msk [vmem:[%s274 + $0x58] sm:$0xf] %vm849, %v807
      %873 = vst.msk [vmem:[%s274 + $0x5c] sm:$0xf] %vm849, %v808
      %874 = vst.msk [vmem:[%s274 + $0x60] sm:$0xf] %vm849, %v809
      %875 = vst.msk [vmem:[%s274 + $0x64] sm:$0xf] %vm849, %v810
      %876 = vst.msk [vmem:[%s274 + $0x68] sm:$0xf] %vm849, %v811
      %877 = vst.msk [vmem:[%s274 + $0x6c] sm:$0xf] %vm849, %v812
      %878 = vst.msk [vmem:[%s274 + $0x70] sm:$0xf] %vm849, %v813
      %879 = vst.msk [vmem:[%s274 + $0x74] sm:$0xf] %vm849, %v814
      %880 = vst.msk [vmem:[%s274 + $0x78] sm:$0xf] %vm849, %v815
      %881 = vst.msk [vmem:[%s274 + $0x7c] sm:$0xf] %vm849, %v816
      %v882 = vunpack.c.l.bf16 %v284
      %v883 = vunpack.c.l.bf16 %v285
      %v884 = vunpack.c.l.bf16 %v286
      %v885 = vunpack.c.l.bf16 %v287
      %v886 = vunpack.c.l.bf16 %v288
      %v887 = vunpack.c.l.bf16 %v289
      %v888 = vunpack.c.l.bf16 %v290
      %v889 = vunpack.c.l.bf16 %v291
      %v890 = vunpack.c.l.bf16 %v292
      %v891 = vunpack.c.l.bf16 %v293
      %v892 = vunpack.c.l.bf16 %v294
      %v893 = vunpack.c.l.bf16 %v295
      %v894 = vunpack.c.l.bf16 %v296
      %v895 = vunpack.c.l.bf16 %v297
      %v896 = vunpack.c.l.bf16 %v298
      %v897 = vunpack.c.l.bf16 %v299
      %v898 = vunpack.c.l.bf16 %v300
      %v899 = vunpack.c.l.bf16 %v301
      %v900 = vunpack.c.l.bf16 %v302
      %v901 = vunpack.c.l.bf16 %v303
      %v902 = vunpack.c.l.bf16 %v304
      %v903 = vunpack.c.l.bf16 %v305
      %v904 = vunpack.c.l.bf16 %v306
      %v905 = vunpack.c.l.bf16 %v307
      %v906 = vunpack.c.l.bf16 %v308
      %v907 = vunpack.c.l.bf16 %v309
      %v908 = vunpack.c.l.bf16 %v310
      %v909 = vunpack.c.l.bf16 %v311
      %v910 = vunpack.c.l.bf16 %v312
      %v911 = vunpack.c.l.bf16 %v313
      %v912 = vunpack.c.l.bf16 %v314
      %v913 = vunpack.c.l.bf16 %v315
      %v914 = vsel %vm397, %v882, 0.0
      %v915 = vsel %vm397, %v883, 0.0
      %v916 = vadd.f32 %v914, %v915
      %v917 = vsel %vm397, %v884, 0.0
      %v918 = vadd.f32 %v916, %v917
      %v919 = vsel %vm397, %v885, 0.0
      %v920 = vadd.f32 %v918, %v919
      %v921 = vsel %vm397, %v886, 0.0
      %v922 = vadd.f32 %v920, %v921
      %v923 = vsel %vm397, %v887, 0.0
      %v924 = vadd.f32 %v922, %v923
      %v925 = vsel %vm397, %v888, 0.0
      %v926 = vadd.f32 %v924, %v925
      %v927 = vsel %vm397, %v889, 0.0
      %v928 = vadd.f32 %v926, %v927
      %v929 = vsel %vm397, %v890, 0.0
      %v930 = vadd.f32 %v928, %v929
      %v931 = vsel %vm397, %v891, 0.0
      %v932 = vadd.f32 %v930, %v931
      %v933 = vsel %vm397, %v892, 0.0
      %v934 = vadd.f32 %v932, %v933
      %v935 = vsel %vm397, %v893, 0.0
      %v936 = vadd.f32 %v934, %v935
      %v937 = vsel %vm397, %v894, 0.0
      %v938 = vadd.f32 %v936, %v937
      %v939 = vsel %vm397, %v895, 0.0
      %v940 = vadd.f32 %v938, %v939
      %v941 = vsel %vm397, %v896, 0.0
      %v942 = vadd.f32 %v940, %v941
      %v943 = vsel %vm397, %v897, 0.0
      %v944 = vadd.f32 %v942, %v943
      %v945 = vsel %vm397, %v898, 0.0
      %v946 = vadd.f32 %v944, %v945
      %v947 = vsel %vm397, %v899, 0.0
      %v948 = vadd.f32 %v946, %v947
      %v949 = vsel %vm397, %v900, 0.0
      %v950 = vadd.f32 %v948, %v949
      %v951 = vsel %vm397, %v901, 0.0
      %v952 = vadd.f32 %v950, %v951
      %v953 = vsel %vm397, %v902, 0.0
      %v954 = vadd.f32 %v952, %v953
      %v955 = vsel %vm397, %v903, 0.0
      %v956 = vadd.f32 %v954, %v955
      %v957 = vsel %vm397, %v904, 0.0
      %v958 = vadd.f32 %v956, %v957
      %v959 = vsel %vm397, %v905, 0.0
      %v960 = vadd.f32 %v958, %v959
      %v961 = vsel %vm397, %v906, 0.0
      %v962 = vadd.f32 %v960, %v961
      %v963 = vsel %vm397, %v907, 0.0
      %v964 = vadd.f32 %v962, %v963
      %v965 = vsel %vm397, %v908, 0.0
      %v966 = vadd.f32 %v964, %v965
      %v967 = vsel %vm397, %v909, 0.0
      %v968 = vadd.f32 %v966, %v967
      %v969 = vsel %vm397, %v910, 0.0
      %v970 = vadd.f32 %v968, %v969
      %v971 = vsel %vm397, %v911, 0.0
      %v972 = vadd.f32 %v970, %v971
      %v973 = vsel %vm397, %v912, 0.0
      %v974 = vadd.f32 %v972, %v973
      %v975 = vsel %vm397, %v913, 0.0
      %v976 = vadd.f32 %v974, %v975
      %v977 = vrot.slane %v976, 4
      %v978 = vadd.f32 %v976, %v977
      %v979 = vrot.slane %v978, 2
      %v980 = vadd.f32 %v978, %v979
      %v981 = vrot.slane %v980, 1
      %v982 = vadd.f32 %v980, %v981
      %v983 = vlaneseq
      %v984 = vshrl.u32 %v983, 7
      %vm985 = vcmp.eq.s32.totalorder %v984, 0
      %v986 = vsel %vm985, %v982, 0.0
      %987 = vst.msk [vmem:[%s282] sm:$0xff] %vm397, %v986
      %s988 = smul.u32 32, %s22
      %p989 = scmp.lt.s32.totalorder %s21, 1
      %s990 = scalar_select %p989, %s21, 1
      %p991 = scmp.lt.s32.totalorder %s988, 31
      %s992 = scalar_select %p991, %s988, 31
      %s993 = smul.addr %s990, 32
      %s994 = sadd.s32 %s992, %s993
      %s995 = smul.addr %s994, 4
      %s996 = scalar_lea.vmem %s4, %s995
      %p997 = scmp.lt.s32.totalorder %s21, 1
      %s998 = scalar_select %p997, %s21, 1
      %p999 = scmp.lt.s32.totalorder %s22, 0
      %s1000 = scalar_select %p999, %s22, 0
      %s1001 = sadd.s32 %s1000, %s998
      %s1002 = smul.addr %s1001, 8
      %s1003 = scalar_lea.vmem %s5, %s1002
      // Predicated region
      $region37: #{tpu_custom_call.1} parent=35 // pred_check
        %p1004 = pneg %p140
      $region38: #{tpu_custom_call.1} parent=35 // pred_check_branch
        %1006 = sbr.rel (%p1004) target = $region40
      $region39: #{tpu_custom_call.1} parent=35 // pred_region
        %s1007 = smul.u32 32, %s22
      $region40: #{tpu_custom_call.1} parent=35 // pred_fallthru
        _
      // Predicated region
      $region41: #{tpu_custom_call.1} parent=35 // pred_check
        %p1008 = pneg %p168
      $region42: #{tpu_custom_call.1} parent=35 // pred_check_branch
        %1010 = sbr.rel (%p1008) target = $region44
      $region43: #{tpu_custom_call.1} parent=35 // pred_region
        _
      $region44: #{tpu_custom_call.1} parent=35 // pred_fallthru
        _
    $region36: #{tpu_custom_call.1} parent=5 // pred_fallthru
      _
    %p1011 = scmp.le.s32.totalorder 2, %s12
    // Predicated region
    $region45: #{tpu_custom_call.1} parent=5 // pred_check
      %p1012 = pneg %p1011
    $region46: #{tpu_custom_call.1} parent=5 // pred_check_branch
      %1014 = sbr.rel (%p1012) target = $region48
    $region47: #{tpu_custom_call.1} parent=5 // pred_region
      %s1015 = ssub.s32 %s12, 2
      // Predicated region
      $region49: #{tpu_custom_call.1} parent=47 // pred_check
        %p1016 = pneg %p146
      $region50: #{tpu_custom_call.1} parent=47 // pred_check_branch
        %1018 = sbr.rel (%p1016) target = $region52
      $region51: #{tpu_custom_call.1} parent=47 // pred_region
        %s1019 = smul.u32 32, %s24
        %p1020 = scmp.lt.s32.totalorder %s23, 1
        %s1021 = scalar_select %p1020, %s23, 1
        %p1022 = scmp.lt.s32.totalorder %s1019, 31
        %s1023 = scalar_select %p1022, %s1019, 31
        %s1024 = smul.addr %s1021, 32
        %s1025 = sadd.s32 %s1023, %s1024
        %s1026 = smul.addr %s1025, 4
        %s1027 = scalar_lea.vmem %s4, %s1026
      $region52: #{tpu_custom_call.1} parent=47 // pred_fallthru
        _
      // Predicated region
      $region53: #{tpu_custom_call.1} parent=47 // pred_check
        %p1028 = pneg %p174
      $region54: #{tpu_custom_call.1} parent=47 // pred_check_branch
        %1030 = sbr.rel (%p1028) target = $region56
      $region55: #{tpu_custom_call.1} parent=47 // pred_region
        %p1031 = scmp.lt.s32.totalorder %s23, 1
        %s1032 = scalar_select %p1031, %s23, 1
        %p1033 = scmp.lt.s32.totalorder %s24, 0
        %s1034 = scalar_select %p1033, %s24, 0
        %s1035 = sadd.s32 %s1034, %s1032
        %s1036 = smul.addr %s1035, 8
        %s1037 = scalar_lea.vmem %s5, %s1036
      $region56: #{tpu_custom_call.1} parent=47 // pred_fallthru
        _
    $region48: #{tpu_custom_call.1} parent=5 // pred_fallthru
      _
  $region6: #{tpu_custom_call.1} parent=0 // loop_footer
    %s16 = sadd.s32 1, %s12
  $region7: #{tpu_custom_call.1} parent=0 // loop_footer_branch
    %11 = sbr.rel target = $region3
  $region8: #{tpu_custom_call.1} parent=0 // loop_exit
    _

</llo_original>
